<compile_context>
chip_gen: v6e
topology: v6e:2x2x1
jax: 0.10.0
libtpu: 0.0.40
codegen_flags: <defaults>
</compile_context>

<pallas_src>
import functools

import jax
import jax.numpy as jnp
from jax.experimental import pallas as pl
from jax.experimental.pallas import tpu as pltpu

_LANES = 128
_SUBLANES = 8
_MAX_TILE_ROWS = 4096  # 2 inputs x 2 buffers x 4096 x 128 x 4B = 8 MiB (v5e-safe)


def _round_up(x, m):
    return ((x + m - 1) // m) * m


def _sse_block_kernel(x_ref, t_ref, o_ref, *, tile_rows, valid_rows, need_mask):
    """Per-grid-step partial sum of squared differences, shaped (8, 128)."""
    x = x_ref[...].astype(jnp.float32)
    t = t_ref[...].astype(jnp.float32)
    d = x - t

    if need_mask:
        # Edge block: rows beyond `valid_rows` contain unspecified data.
        row0 = pl.program_id(0) * tile_rows
        row_ids = row0 + jax.lax.broadcasted_iota(
            jnp.int32, (tile_rows, _LANES), 0
        )
        d = jnp.where(row_ids < valid_rows, d, 0.0)

    sq = d * d
    # vreg-aligned reduction: each [k, :, :] slice is exactly one (8, 128) tile,
    # so the axis-0 sum is pure elementwise VPU adds (no XLU in the hot loop).
    o_ref[...] = jnp.sum(
        sq.reshape(tile_rows // _SUBLANES, _SUBLANES, _LANES), axis=0
    )


@functools.partial(jax.jit, static_argnames=("content_weight",))
def content_loss(inp, target, content_weight):
    """cw * mean((inp - target)^2), reduction done inside a Pallas kernel."""
    assert inp.shape == target.shape, "mse_loss requires matching shapes"
    n_elems = inp.size

    x = inp.reshape(-1)
    t = target.reshape(-1)

    # Only pad when numel is not a multiple of 128 (needed to form the lane-dense
    # 2D view).  Pads are equal in both tensors -> contribute 0 to the sum.
    rem = n_elems % _LANES
    if rem:
        # TODO(synk): this tiny (<128 elem) pad still materializes a copy of the
        # flat arrays; only hit when numel % 128 != 0.
        pad = _LANES - rem
        x = jnp.pad(x, (0, pad))
        t = jnp.pad(t, (0, pad))

    rows = x.size // _LANES
    x2d = x.reshape(rows, _LANES)
    t2d = t.reshape(rows, _LANES)

    # Row alignment: 8 sublanes per f32 vreg, 16 for bf16/fp16, 32 for int8/fp8.
    itemsize = x2d.dtype.itemsize
    row_align = max(_SUBLANES, 32 // max(int(itemsize), 1))
    tile_rows = min(_MAX_TILE_ROWS, _round_up(rows, row_align))
    grid = (pl.cdiv(rows, tile_rows),)
    need_mask = (rows % tile_rows) != 0

    kernel = functools.partial(
        _sse_block_kernel,
        tile_rows=tile_rows,
        valid_rows=rows,
        need_mask=need_mask,
    )

    partials = pl.pallas_call(
        kernel,
        out_shape=jax.ShapeDtypeStruct((grid[0] * _SUBLANES, _LANES), jnp.float32),
        grid_spec=pltpu.PrefetchScalarGridSpec(
            num_scalar_prefetch=0,
            grid=grid,
            in_specs=[
                pl.BlockSpec((tile_rows, _LANES), lambda i: (i, 0)),
                pl.BlockSpec((tile_rows, _LANES), lambda i: (i, 0)),
            ],
            out_specs=pl.BlockSpec((_SUBLANES, _LANES), lambda i: (i, 0)),
        ),
        compiler_params=pltpu.CompilerParams(
            dimension_semantics=("parallel",),
        ),
    )(x2d, t2d)

    # Tiny final reduction + normalization in plain XLA.
    sse = jnp.sum(partials)
    mse = sse / jnp.float32(n_elems)
    return jnp.float32(content_weight) * mse


if __name__ == "__main__":
    key = jax.random.PRNGKey(0)
    k1, k2 = jax.random.split(key)

    # NCHW inputs, small shapes.
    x = jax.random.normal(k1, (2, 4, 16, 16), dtype=jnp.float32)
    tgt = jax.random.normal(k2, (2, 4, 16, 16), dtype=jnp.float32)
    cw = 0.5

    out = content_loss(x, tgt, cw)
    out = jax.block_until_ready(out)

    # Reference check (plain JAX).  target.detach() is autograd-only -> no-op here.
    ref = cw * jnp.mean((x - tgt) ** 2)
    assert jnp.allclose(out, ref, rtol=1e-5, atol=1e-6), (out, ref)

    print("KERNEL_OK")
</pallas_src>

<mosaic_0001>
module attributes {stable_mosaic.version = 11 : i64} {
  func.func @_sse_block_kernel(%arg0: i32, %arg1: memref<16x128xf32, #tpu.memory_space<vmem>>, %arg2: memref<16x128xf32, #tpu.memory_space<vmem>>, %arg3: memref<8x128xf32, #tpu.memory_space<vmem>>) attributes {dimension_semantics = [#tpu.dimension_semantics<parallel>], iteration_bounds = array<i64: 1>, scalar_prefetch = 0 : i64, scratch_operands = 0 : i64, tpu.core_type = #tpu.core_type<tc>, window_params = [{transform_indices = @transform_0, window_bounds = array<i64: 16, 128>}, {transform_indices = @transform_1, window_bounds = array<i64: 16, 128>}, {transform_indices = @transform_2, window_bounds = array<i64: 8, 128>}]} {
    %c0 = arith.constant 0 : index
    %c0_0 = arith.constant 0 : index
    %0 = vector.load %arg1[%c0, %c0_0] : memref<16x128xf32, #tpu.memory_space<vmem>>, vector<16x128xf32>
    %c0_1 = arith.constant 0 : index
    %c0_2 = arith.constant 0 : index
    %1 = vector.load %arg2[%c0_1, %c0_2] : memref<16x128xf32, #tpu.memory_space<vmem>>, vector<16x128xf32>
    %2 = arith.subf %0, %1 : vector<16x128xf32>
    %3 = arith.mulf %2, %2 : vector<16x128xf32>
    %4 = vector.shape_cast %3 : vector<16x128xf32> to vector<2x8x128xf32>
    %cst = arith.constant dense<0.000000e+00> : vector<8x128xf32>
    %5 = vector.multi_reduction <add>, %4, %cst [0] : vector<2x8x128xf32> to vector<8x128xf32>
    %c0_3 = arith.constant 0 : index
    %c0_4 = arith.constant 0 : index
    %6 = vector.load %arg3[%c0_3, %c0_4] : memref<8x128xf32, #tpu.memory_space<vmem>>, vector<8x128xf32>
    tpu.vector_store %arg3[%c0_3, %c0_4], %5 {strides = array<i32>} : memref<8x128xf32, #tpu.memory_space<vmem>>, vector<8x128xf32>,
    return
  }
  func.func @transform_0(%arg0: i32) -> (i32, i32) {
    %c0_i32 = arith.constant 0 : i32
    %c0_i32_0 = arith.constant 0 : i32
    return %arg0, %c0_i32 : i32, i32
  }
  func.func @transform_1(%arg0: i32) -> (i32, i32) {
    %c0_i32 = arith.constant 0 : i32
    %c0_i32_0 = arith.constant 0 : i32
    return %arg0, %c0_i32 : i32, i32
  }
  func.func @transform_2(%arg0: i32) -> (i32, i32) {
    %c0_i32 = arith.constant 0 : i32
    %c0_i32_0 = arith.constant 0 : i32
    return %arg0, %c0_i32 : i32, i32
  }
}

</mosaic_0001>

<llo_original>
// kernel: content_loss.1
$region0: #{content_loss.1}
  #allocation0 [shape = 'u32[]', space=smem, size = 0x4, offset = 0x4, fixed_abs, tag = 'smem constant byte address 0x4 - core index']
  #allocation1 [shape = 'u32[144,128]{1,0:T(1,128)}', space=vmem, size = 0x12000, scoped, tag = 'internal scratch']
  %s0 = inlined_call_operand.vmem [shape: f32[16,128], index: 0, kind: input, shape index: {}]
  %s1 = inlined_call_operand.vmem [shape: f32[16,128], index: 1, kind: input, shape index: {}]
  %s2 = inlined_call_operand.vmem [shape: f32[8,128], index: 2, kind: output, shape index: {}]
  %s3 = sld [smem:[#allocation0]]
  $region18: #{content_loss.1} parent=0
    _
  %s5 = ssub.s32 1, %s3
  %s6 = scalar_select 0, %s5, %s3
  // Predicated region
  $region2: #{content_loss.1} parent=0 // pred_check
    _
  $region3: #{content_loss.1} parent=0 // pred_check_branch
    %8 = sbr.rel (0) target = $region5
  $region4: #{content_loss.1} parent=0 // pred_region
    _
  $region5: #{content_loss.1} parent=0 // pred_fallthru
    _
  // Predicated region
  $region6: #{content_loss.1} parent=0 // pred_check
    _
  $region7: #{content_loss.1} parent=0 // pred_check_branch
    %10 = sbr.rel (0) target = $region9
  $region8: #{content_loss.1} parent=0 // pred_region
    _
  $region9: #{content_loss.1} parent=0 // pred_fallthru
    _
  %v11 = vld [vmem:[%s0] sm:$0xff]
  %v12 = vld [vmem:[%s0 + $0x8] sm:$0xff]
  %v13 = vld [vmem:[%s1] sm:$0xff]
  %v14 = vld [vmem:[%s1 + $0x8] sm:$0xff]
  %v15 = vsub.f32 %v11, %v13
  %v16 = vsub.f32 %v12, %v14
  %v17 = vmul.f32 %v15, %v15
  %v18 = vmul.f32 %v16, %v16
  %v19 = vadd.f32 %v17, %v18
  %20 = vst [vmem:[%s2] sm:$0xff] %v19
  // Predicated region
  $region10: #{content_loss.1} parent=0 // pred_check
    _
  $region11: #{content_loss.1} parent=0 // pred_check_branch
    %22 = sbr.rel (0) target = $region13
  $region12: #{content_loss.1} parent=0 // pred_region
    _
  $region13: #{content_loss.1} parent=0 // pred_fallthru
    _
  // Predicated region
  $region14: #{content_loss.1} parent=0 // pred_check
    _
  $region15: #{content_loss.1} parent=0 // pred_check_branch
    %24 = sbr.rel (0) target = $region17
  $region16: #{content_loss.1} parent=0 // pred_region
    _
  $region17: #{content_loss.1} parent=0 // pred_fallthru
    _

</llo_original>
